<compile_context>
chip_gen: v5e
topology: v5e:2x2
jax: 0.10.0
libtpu: 0.0.40
codegen_flags: <defaults>
</compile_context>

<pallas_src>
import functools
import math

import jax
import jax.numpy as jnp
from jax import lax
from jax.experimental import pallas as pl
from jax.experimental.pallas import tpu as pltpu


# ---------------------------------------------------------------------------
# Path A (small vocab): table resident in VMEM, one-hot MXU gather.
# ---------------------------------------------------------------------------
def _embed_onehot_kernel(ids_ref, table_ref, out_ref, *, scale):
    # ids_ref:   (TN, 1) int32 (VMEM)
    # table_ref: (V, D) whole table, VMEM-resident (constant index map)
    # out_ref:   (TN, D)
    vocab = table_ref.shape[0]
    ids = jnp.clip(ids_ref[...], 0, vocab - 1)                       # (TN, 1)
    col = lax.broadcasted_iota(jnp.int32, (ids.shape[0], vocab), 1)  # (TN, V)
    onehot = (col == ids).astype(table_ref.dtype)                    # (TN, V)
    acc = jnp.dot(onehot, table_ref[...], preferred_element_type=jnp.float32)
    out_ref[...] = (acc * jnp.float32(scale)).astype(out_ref.dtype)


# ---------------------------------------------------------------------------
# Path B (large vocab): table stays in HBM; one row DMA per token, landing
# directly in the output block; single aggregate semaphore wait per tile.
# ---------------------------------------------------------------------------
def _embed_gather_kernel(ids_ref, table_hbm, out_ref, sem, *, tn, vocab, scale):
    # ids_ref:   (N_pad,) int32 in SMEM (scalar-prefetched token ids)
    # table_hbm: (V, D) raw HBM ref (memory_space=pl.ANY)
    # out_ref:   (TN, D) output block in VMEM -- DMAs land straight here
    # sem:       (1,) shared DMA semaphore
    base = pl.program_id(0) * tn

    def _start(t, carry):
        tok = jnp.clip(ids_ref[base + t], 0, vocab - 1)   # in-kernel clamp (scalar)
        pltpu.make_async_copy(
            table_hbm.at[pl.ds(tok, 1), :],
            out_ref.at[pl.ds(t, 1), :],
            sem.at[0],
        ).start()
        return carry

    # Unrolled issue keeps descriptor pushes back-to-back (misc slot busy).
    lax.fori_loop(0, tn, _start, 0, unroll=8)

    # ONE aggregate wait: each row copy signals `sem` with D*itemsize bytes;
    # a single wait descriptor covering the full (TN, D) block drains exactly
    # tn*D*itemsize bytes, i.e. returns only after ALL rows have landed.
    # (Do not read out_ref before this wait -- rows land out of order.)
    pltpu.make_async_copy(out_ref, out_ref, sem.at[0]).wait()

    # In-place scale in the output dtype (no f32 intermediate for bf16 tables).
    out_ref[...] = out_ref[...] * jnp.asarray(scale, dtype=out_ref.dtype)


def _round_up(x, m):
    return (x + m - 1) // m * m


def input_embeddings(x, table, d_model=None, *, force_gather=False):
    """Pallas TPU equivalent of InputEmbeddings.forward: table[x] * sqrt(d_model).

    x:     (B, S) integer token ids
    table: (V, D) embedding table
    returns (B, S, D)
    """
    B, S = x.shape
    V, D = table.shape
    if d_model is None:
        d_model = D
    assert D == d_model, "embedding dim must equal d_model"
    scale = math.sqrt(d_model)

    itemsize = jnp.dtype(table.dtype).itemsize
    row_bytes = D * itemsize
    table_bytes = V * row_bytes
    N = B * S

    # Small-table fast path: whole table comfortably VMEM-resident.
    use_small = (not force_gather) and (table_bytes <= (1 << 20)) and (V <= 1024)

    # Token tile: ~1 MiB lane-dense output slabs (amortizes ~0.35 us/grid-step
    # overhead; >=512-wide tiles reach 85%+ of HBM roofline). Capped so the
    # gather path keeps at most ~1K row DMAs in flight on one semaphore.
    cap = 512 if use_small else 1024
    tn = max(8, min(cap, (1 << 20) // max(row_bytes, 1)))
    if N < tn:
        tn = max(N, 1)
    tn = _round_up(tn, 8)
    n_pad = _round_up(N, tn)
    grid = (n_pad // tn,)

    ids = x.reshape(-1).astype(jnp.int32)
    if n_pad != N:
        # Padded tail tokens fetch row 0; sliced off before returning.
        ids = jnp.pad(ids, (0, n_pad - N))

    # VMEM budget derived from actual tile footprint (double-buffered), with
    # headroom; capped so it also fits v7x's 64 MiB physical VMEM per TC.
    out_tile_bytes = tn * row_bytes
    if use_small:
        needed = 2 * out_tile_bytes + 2 * table_bytes + 2 * tn * 4
    else:
        needed = 2 * out_tile_bytes
    vmem_limit = int(min(max(needed + (8 << 20), 16 << 20), 48 << 20))

    if use_small:
        kernel = functools.partial(_embed_onehot_kernel, scale=scale)
        out_flat = pl.pallas_call(
            kernel,
            out_shape=jax.ShapeDtypeStruct((n_pad, D), table.dtype),
            grid_spec=pltpu.PrefetchScalarGridSpec(
                num_scalar_prefetch=0,
                grid=grid,
                in_specs=[
                    pl.BlockSpec((tn, 1), lambda i: (i, 0)),   # token ids column
                    pl.BlockSpec((V, D), lambda i: (0, 0)),    # whole table, resident
                ],
                out_specs=pl.BlockSpec((tn, D), lambda i: (i, 0)),
            ),
            compiler_params=pltpu.CompilerParams(
                dimension_semantics=("parallel",),
                vmem_limit_bytes=vmem_limit,
            ),
        )(ids.reshape(n_pad, 1), table)
    else:
        kernel = functools.partial(_embed_gather_kernel, tn=tn, vocab=V, scale=scale)
        out_flat = pl.pallas_call(
            kernel,
            out_shape=jax.ShapeDtypeStruct((n_pad, D), table.dtype),
            grid_spec=pltpu.PrefetchScalarGridSpec(
                num_scalar_prefetch=1,                          # ids -> SMEM
                grid=grid,
                in_specs=[
                    pl.BlockSpec(memory_space=pl.ANY),          # table stays in HBM
                ],
                out_specs=pl.BlockSpec((tn, D), lambda i, ids_ref: (i, 0)),
                scratch_shapes=[
                    pltpu.SemaphoreType.DMA((1,)),              # shared DMA semaphore
                ],
            ),
            compiler_params=pltpu.CompilerParams(
                dimension_semantics=("parallel",),              # shard tiles across TCs
                vmem_limit_bytes=vmem_limit,
            ),
        )(ids, table)

    return out_flat[:N].reshape(B, S, D)


if __name__ == "__main__":
    # Small deterministic setup consistent with the module:
    #   d_model=128, vocabulary_size=64, batch=2, seq=8
    d_model = 128
    vocab_size = 64
    B, S = 2, 8

    key = jax.random.PRNGKey(0)
    k_tab, k_ids = jax.random.split(key)

    # nn.Embedding default init: N(0, 1)
    table = jax.random.normal(k_tab, (vocab_size, d_model), dtype=jnp.float32)
    x = jax.random.randint(k_ids, (B, S), 0, vocab_size, dtype=jnp.int32)

    ref = jnp.take(table, x, axis=0) * jnp.float32(math.sqrt(d_model))

    # Path A: small-table fast path (VMEM-resident table, one-hot MXU gather).
    out_small = jax.block_until_ready(input_embeddings(x, table, d_model))
    assert out_small.shape == (B, S, d_model)
    assert jnp.allclose(out_small, ref, atol=1e-5, rtol=1e-5)

    # Path B: HBM row-gather path (per-row DMA into out block, aggregate wait).
    out_gather = jax.block_until_ready(
        input_embeddings(x, table, d_model, force_gather=True))
    assert out_gather.shape == (B, S, d_model)
    assert jnp.allclose(out_gather, ref, atol=1e-5, rtol=1e-5)

    print("KERNEL_OK")
</pallas_src>

<mosaic_0001>
module attributes {stable_mosaic.version = 11 : i64} {
  func.func @_embed_onehot_kernel(%arg0: i32, %arg1: memref<16x1xi32, #tpu.memory_space<vmem>>, %arg2: memref<64x128xf32, #tpu.memory_space<vmem>>, %arg3: memref<16x128xf32, #tpu.memory_space<vmem>>) attributes {dimension_semantics = [#tpu.dimension_semantics<parallel>], iteration_bounds = array<i64: 1>, scalar_prefetch = 0 : i64, scratch_operands = 0 : i64, tpu.core_type = #tpu.core_type<tc>, window_params = [{transform_indices = @transform_0, window_bounds = array<i64: 16, 1>}, {pipeline_mode = #tpu.pipeline_mode<synchronous>, transform_indices = @transform_1, window_bounds = array<i64: 64, 128>}, {transform_indices = @transform_2, window_bounds = array<i64: 16, 128>}]} {
    %c0 = arith.constant 0 : index
    %c0_0 = arith.constant 0 : index
    %0 = vector.load %arg1[%c0, %c0_0] : memref<16x1xi32, #tpu.memory_space<vmem>>, vector<16x1xi32>
    %c0_i32 = arith.constant 0 : i32
    %c63_i32 = arith.constant 63 : i32
    %1 = vector.broadcast %c0_i32 : i32 to vector<16x1xi32>
    %2 = arith.maxsi %1, %0 : vector<16x1xi32>
    %3 = vector.broadcast %c63_i32 : i32 to vector<16x1xi32>
    %4 = arith.minsi %3, %2 : vector<16x1xi32>
    %5 = tpu.iota {dimensions = array<i32: 1>} : vector<16x64xi32>
    %6 = vector.broadcast %4 : vector<16x1xi32> to vector<16x64xi32>
    %7 = arith.cmpi eq, %5, %6 : vector<16x64xi32>
    %8 = arith.extui %7 : vector<16x64xi1> to vector<16x64xi32>
    %9 = arith.sitofp %8 : vector<16x64xi32> to vector<16x64xf32>
    %c0_1 = arith.constant 0 : index
    %c0_2 = arith.constant 0 : index
    %10 = vector.load %arg2[%c0_1, %c0_2] : memref<64x128xf32, #tpu.memory_space<vmem>>, vector<64x128xf32>
    %cst = arith.constant dense<0.000000e+00> : vector<16x128xf32>
    %11 = tpu.matmul %9, %10, %cst {dimension_numbers = #tpu.dot_dimension_numbers<[1], [0], [0], [1], [0, 0, 1, 1], [], []>} : vector<16x64xf32>, vector<64x128xf32>, vector<16x128xf32> -> vector<16x128xf32>
    %cst_3 = arith.constant 11.3137083 : f32
    %12 = vector.broadcast %cst_3 : f32 to vector<16x128xf32>
    %13 = arith.mulf %11, %12 : vector<16x128xf32>
    %c0_4 = arith.constant 0 : index
    %c0_5 = arith.constant 0 : index
    %14 = vector.load %arg3[%c0_4, %c0_5] : memref<16x128xf32, #tpu.memory_space<vmem>>, vector<16x128xf32>
    tpu.vector_store %arg3[%c0_4, %c0_5], %13 {strides = array<i32>} : memref<16x128xf32, #tpu.memory_space<vmem>>, vector<16x128xf32>,
    return
  }
  func.func @transform_0(%arg0: i32) -> (i32, i32) {
    %c0_i32 = arith.constant 0 : i32
    %c0_i32_0 = arith.constant 0 : i32
    return %arg0, %c0_i32 : i32, i32
  }
  func.func @transform_1(%arg0: i32) -> (i32, i32) {
    %c0_i32 = arith.constant 0 : i32
    %c0_i32_0 = arith.constant 0 : i32
    %c0_i32_1 = arith.constant 0 : i32
    return %c0_i32, %c0_i32_0 : i32, i32
  }
  func.func @transform_2(%arg0: i32) -> (i32, i32) {
    %c0_i32 = arith.constant 0 : i32
    %c0_i32_0 = arith.constant 0 : i32
    return %arg0, %c0_i32 : i32, i32
  }
}

</mosaic_0001>

<llo_original>
// kernel: tpu_custom_call.1
$region0: #{tpu_custom_call.1}
  #allocation0 [shape = 'u32[]', space=smem, size = 0x4, offset = 0x4, fixed_abs, tag = 'smem constant byte address 0x4 - core index']
  #allocation1 [shape = 'u32[72,128]{1,0:T(1,128)}', space=vmem, size = 0x9000, scoped, tag = 'internal scratch']
  %s0 = inlined_call_operand.vmem [shape: s32[16,1], index: 0, kind: input, shape index: {}]
  %s1 = inlined_call_operand.hbm [shape: f32[64,128], index: 1, kind: input, shape index: {}]
  %s2 = inlined_call_operand.hbm [shape: f32[16,128], index: 2, kind: output, shape index: {}]
  %s3 = sld [smem:[#allocation0]]
  $region22: #{tpu_custom_call.1} parent=0
    _
  %s5 = ssub.s32 1, %s3
  %s6 = scalar_select 0, %s5, %s3
  $region1: #{tpu_custom_call.1} parent=0
    #allocation2 [shape = 'u8[32768]{0}', space=vmem, size = 0x8000, scoped, tag = 'input window, operand 1, single buffered']
    #allocation3 [shape = 's32[1]{0}', space=sflag, size = 0x4, scoped, tag = 'scoped memory for tpu_custom_call.1']
    #allocation4 [shape = 's32[1]{0}', space=sflag, size = 0x4, scoped, tag = 'scoped memory for tpu_custom_call.1']
    #allocation5 [shape = 'u8[8192]{0}', space=vmem, size = 0x2000, scoped, tag = 'output window, operand 0, single buffered']
    %7 = vsyncpa [#allocation3], 0
    %8 = vsyncpa [#allocation4], 0
    // Predicated region
    $region2: #{tpu_custom_call.1} parent=1 // pred_check
      _
    $region3: #{tpu_custom_call.1} parent=1 // pred_check_branch
      %10 = sbr.rel (0) target = $region5
    $region4: #{tpu_custom_call.1} parent=1 // pred_region
      _
    $region5: #{tpu_custom_call.1} parent=1 // pred_fallthru
      _
    // Predicated region
    $region6: #{tpu_custom_call.1} parent=1 // pred_check
      _
    $region7: #{tpu_custom_call.1} parent=1 // pred_check_branch
      %12 = sbr.rel (0) target = $region9
    $region8: #{tpu_custom_call.1} parent=1 // pred_region
      %14 = vsyncadd [#allocation3], 0
      %s15 = sshll.u32 %s1, 4
      %s16 = int_to_ptr.hbm [resolvable:$true] %s15
      %s17 = sshll.u32 [#allocation2], 4
      %s18 = int_to_ptr.vmem [resolvable:$true] %s17
      %23 = dma.hbm_to_vmem [thread:$0]  %s16, 1024, %s18, [#allocation3], 128, 128, 8
    $region9: #{tpu_custom_call.1} parent=1 // pred_fallthru
      _
    // Predicated region
    $region10: #{tpu_custom_call.1} parent=1 // pred_check
      _
    $region11: #{tpu_custom_call.1} parent=1 // pred_check_branch
      %25 = sbr.rel (0) target = $region13
    $region12: #{tpu_custom_call.1} parent=1 // pred_region
      %27 = dma.done [#allocation3], 1024
    $region13: #{tpu_custom_call.1} parent=1 // pred_fallthru
      _
    %v28 = vld [vmem:[%s0] sm:$0xff]
    %v29 = vld [vmem:[%s0 + $0x8] sm:$0xff]
    %vm30 = vcmp.gt.s32.totalorder %v28, 0
    %v31 = vsel %vm30, %v28, 0
    %vm32 = vcmp.gt.s32.totalorder %v29, 0
    %v33 = vsel %vm32, %v29, 0
    %vm34 = vcmp.lt.s32.totalorder %v31, 63
    %v35 = vsel %vm34, %v31, 63
    %vm36 = vcmp.lt.s32.totalorder %v33, 63
    %v37 = vsel %vm36, %v33, 63
    %v38 = vlaneseq
    %v39 = vand.u32 %v38, 127
    %40 = vset.pattern.permute.xlu0 0
    %41 = vperm.xlu0 %40, %v35
    %v42 = vpop.permute.xlu0 %41
    %43 = vset.pattern.permute.xlu0 0
    %44 = vperm.xlu0 %43, %v37
    %v45 = vpop.permute.xlu0 %44
    %vm46 = vcmp.eq.s32.totalorder %v39, %v42
    %vm47 = vcmp.eq.s32.totalorder %v39, %v45
    %v48 = vsel %vm46, 1, 0
    %v49 = vsel %vm47, 1, 0
    %v50 = vcvt.s32.f32 %v48
    %v51 = vcvt.s32.f32 %v49
    %v52 = vld [vmem:[#allocation2] sm:$0xff]
    %v53 = vld [vmem:[#allocation2 + $0x8] sm:$0xff]
    %v54 = vld [vmem:[#allocation2 + $0x10] sm:$0xff]
    %v55 = vld [vmem:[#allocation2 + $0x18] sm:$0xff]
    %v56 = vld [vmem:[#allocation2 + $0x20] sm:$0xff]
    %v57 = vld [vmem:[#allocation2 + $0x28] sm:$0xff]
    %v58 = vld [vmem:[#allocation2 + $0x30] sm:$0xff]
    %v59 = vld [vmem:[#allocation2 + $0x38] sm:$0xff]
    %vm60 = vcmask 523264
    %v62 = vsel %vm60, %v50, 0
    %v65 = vsel %vm60, %v51, 0
    %67 = vmatpush.msra.mxu0 0.0
    %68 = vmatpush.msra.mxu0 0.0
    %69 = vmatpush.msra.mxu0 0.0
    %70 = vmatpush.msra.mxu0 0.0
    %71 = vmatpush.msra.mxu0 0.0
    %72 = vmatpush.msra.mxu0 0.0
    %73 = vmatpush.msra.mxu0 0.0
    %74 = vmatpush.msra.mxu0 0.0
    %75 = vmatpush.msra.mxu0 %v59
    %76 = vmatpush.msra.mxu0 %v58
    %77 = vmatpush.msra.mxu0 %v57
    %78 = vmatpush.msra.mxu0 %v56
    %79 = vmatpush.msra.mxu0 %v55
    %80 = vmatpush.msra.mxu0 %v54
    %81 = vmatpush.msra.mxu0 %v53
    %82 = vmatpush.msra.mxu0 %v52
    %83 = vmatmul.f32.gmra.mxu0 %v62
    %v84 = vpop.f32.mrf.mxu0
    %v85 = vadd.f32 0.0, %v84
    %86 = vmatmul.f32.gmra.mxu0 %v65
    %v87 = vpop.f32.mrf.mxu0
    %v88 = vadd.f32 0.0, %v87
    %89 = vdwg.mxu0
    %v90 = vmul.f32 %v85, 11.313708
    %v91 = vmul.f32 %v88, 11.313708
    %92 = vst [vmem:[#allocation5] sm:$0xff] %v90
    %93 = vst [vmem:[#allocation5 + $0x8] sm:$0xff] %v91
    // Predicated region
    $region14: #{tpu_custom_call.1} parent=1 // pred_check
      _
    $region15: #{tpu_custom_call.1} parent=1 // pred_check_branch
      %95 = sbr.rel (0) target = $region17
    $region16: #{tpu_custom_call.1} parent=1 // pred_region
      %97 = vsyncadd [#allocation4], 0
      %s98 = sshll.u32 [#allocation5], 4
      %s99 = int_to_ptr.vmem [resolvable:$true] %s98
      %s100 = sshll.u32 %s2, 4
      %s101 = int_to_ptr.hbm [resolvable:$true] %s100
      %106 = dma.vmem_to_hbm [thread:$0]  %s99, 256, %s101, [#allocation4], 128, 128, 8
    $region17: #{tpu_custom_call.1} parent=1 // pred_fallthru
      _
    // Predicated region
    $region18: #{tpu_custom_call.1} parent=1 // pred_check
      _
    $region19: #{tpu_custom_call.1} parent=1 // pred_check_branch
      %108 = sbr.rel (0) target = $region21
    $region20: #{tpu_custom_call.1} parent=1 // pred_region
      %110 = dma.done [#allocation4], 256
    $region21: #{tpu_custom_call.1} parent=1 // pred_fallthru
      _
    %111 = vsyncpa [#allocation3], 1
    %112 = vsyncpa [#allocation4], 1

</llo_original>
